<compile_context>
chip_gen: v7x
topology: tpu7x:2x2x1
jax: 0.10.0
libtpu: 0.0.40
codegen_flags: <defaults>
</compile_context>

<pallas_src>
import functools

import numpy as np
import jax
import jax.numpy as jnp
from jax.experimental import pallas as pl
from jax.experimental.pallas import tpu as pltpu

# Fixed (non-learned) gaussian membership parameters from the module defaults.
GAUSSIAN_MEANS = (-1.645, -1.08, -0.739, -0.468, -0.228, 0.0,
                  0.228, 0.468, 0.739, 1.08, 1.645)
GAUSSIAN_STDS = (0.283, 0.17, 0.134, 0.118, 0.114, 0.114,
                 0.114, 0.118, 0.134, 0.17, 0.283)
K = len(GAUSSIAN_MEANS)


def _round_up(x, m):
    return ((x + m - 1) // m) * m


def _weave_gather_kernel(node_ref, seg_ref, offset_ref, expand_s_ref,
                         expand_ref, reduce_ref, w_ref,
                         out_ref, s_acc_ref, *, total_v):
    """One grid step: gaussian histogram for TILE_V nodes (lane-dense blocked
    column layout col = k*D + d), segment-sum into this split's (G8, K*D)
    accumulator.  Last step of the split: pre-bias/pre-tanh linear partial."""
    i = pl.program_id(1)

    @pl.when(i == 0)
    def _init():
        s_acc_ref[...] = jnp.zeros_like(s_acc_ref)

    tile = node_ref.shape[0]
    # Logical node-tile index (NOT the clamped block index used for the DMA).
    logical_tile = pl.program_id(0) * pl.num_programs(1) + i
    row = logical_tile * tile + jax.lax.broadcasted_iota(
        jnp.int32, (tile, 1), 0)                        # (TILE_V, 1)
    # Ragged mask: zero garbage / out-of-range rows BEFORE the exp chain so no
    # NaN can leak through the member @ h accumulate (0 * NaN = NaN otherwise).
    x = jnp.where(row < total_v, node_ref[...], jnp.float32(0.0))   # (TILE_V, D)

    # inv_std and 0.5 are folded into expand_s / offset on the host:
    #   z[:, k*D+d] = sqrt(0.5) * (x[:, d] - mean_k) / std_k
    z = jnp.dot(x, expand_s_ref[...],
                preferred_element_type=jnp.float32) - offset_ref[...]
    p = jnp.exp(-(z * z)) + jnp.float32(1e-7)           # (TILE_V, K*D)

    # Per-(node, feature) normalization: denom[v, d] = sum_k p[v, k*D + d]
    denom = jnp.dot(p, reduce_ref[...], preferred_element_type=jnp.float32)
    inv = pl.reciprocal(denom, approx=True)
    inv = inv * (2.0 - denom * inv)                     # one Newton step
    h = p * jnp.dot(inv, expand_ref[...], preferred_element_type=jnp.float32)

    # On-the-fly one-hot membership block (G8, TILE_V); padded ids (-1) give
    # all-zero columns and are dropped.
    seg = seg_ref[...]                                  # (1, TILE_V) int32
    g8 = s_acc_ref.shape[0]
    member = (jax.lax.broadcasted_iota(jnp.int32, (g8, tile), 0)
              == seg).astype(jnp.float32)               # (G8, TILE_V)

    # Segment-sum BEFORE the weight matmul:  S += member @ H   (G8, K*D)
    s_acc_ref[...] += jnp.dot(member, h, preferred_element_type=jnp.float32)

    @pl.when(i == pl.num_programs(1) - 1)
    def _finalize():
        # Per-split PRE-bias / PRE-tanh partial (linearity); the sum over
        # splits, bias add and tanh happen in the XLA epilogue.
        out_ref[...] = jnp.dot(s_acc_ref[...], w_ref[...],
                               preferred_element_type=jnp.float32)[None]


@functools.partial(jax.jit,
                   static_argnames=("num_graphs", "tile_v", "num_splits"))
def weave_gather(node_feats, segment_ids, num_graphs, w_interleaved_T, bias,
                 *, tile_v=2048, num_splits=2):
    """w_interleaved_T: (D*K, D) f32, torch interleaved row order row = d*K + k."""
    v, d = node_feats.shape
    kd = K * d
    g8 = _round_up(max(int(num_graphs), 1), 8)

    # Node tile: one full (8-aligned) block for small V, else a multiple of 128.
    if v <= tile_v:
        tile = _round_up(v, 8)
    else:
        tile = max(128, (tile_v // 128) * 128)
    n_real = -(-v // tile)                       # real node tiles
    splits = max(1, min(int(num_splits), n_real))  # 2-TC split on v7x
    n_per_split = -(-n_real // splits)
    seg_len = splits * n_per_split * tile

    # node_feats is NOT padded (no extra HBM read+write of the big array);
    # only the tiny int32 segment-id vector is padded (-1 => zero one-hot col).
    node_f32 = node_feats.astype(jnp.float32)
    seg_p = jnp.pad(segment_ids.astype(jnp.int32), (0, seg_len - v),
                    constant_values=-1).reshape(1, seg_len)

    # Small constant operands (resident in VMEM across the whole grid).
    means = np.asarray(GAUSSIAN_MEANS, np.float32)
    stds = np.asarray(GAUSSIAN_STDS, np.float32)
    scale = (np.sqrt(0.5) / stds).astype(np.float32)               # sqrt(.5)/std_k
    eye = np.eye(d, dtype=np.float32)
    expand = np.tile(eye, (1, K))                                   # (D, K*D) 0/1
    expand_s = expand * np.repeat(scale, d)[None, :]                # scaled cols
    offset_row = np.repeat(means * scale, d)[None, :]               # (1, K*D)
    reduce_m = np.tile(eye, (K, 1))                                 # (K*D, D)

    # Permute linear weight rows from interleaved (d*K + k) to blocked
    # (k*D + d) so it matches the in-kernel H column layout (exact permutation).
    w_blocked = (w_interleaved_T.astype(jnp.float32)
                 .reshape(d, K, d).transpose(1, 0, 2).reshape(kd, d))

    n_last = n_real - 1
    const2 = lambda c, i: (0, 0)
    grid_spec = pltpu.PrefetchScalarGridSpec(
        num_scalar_prefetch=0,
        grid=(splits, n_per_split),
        in_specs=[
            # Clamp so no node block is fully out of bounds; the logical-row
            # mask in-kernel drops any re-read / ragged rows.
            pl.BlockSpec((tile, d),
                         lambda c, i: (jnp.minimum(c * n_per_split + i, n_last), 0)),
            pl.BlockSpec((1, tile), lambda c, i: (0, c * n_per_split + i)),
            pl.BlockSpec((1, kd), const2),      # offset row (mean*scale)
            pl.BlockSpec((d, kd), const2),      # expand, scaled by sqrt(.5)/std
            pl.BlockSpec((d, kd), const2),      # expand (0/1, for 1/denom)
            pl.BlockSpec((kd, d), const2),      # reduce (block-sum) matrix
            pl.BlockSpec((kd, d), const2),      # W blocked
        ],
        out_specs=pl.BlockSpec((1, g8, d), lambda c, i: (c, 0, 0)),
        scratch_shapes=[pltpu.VMEM((g8, kd), jnp.float32)],
    )

    partials = pl.pallas_call(
        functools.partial(_weave_gather_kernel, total_v=v),
        out_shape=jax.ShapeDtypeStruct((splits, g8, d), jnp.float32),
        grid_spec=grid_spec,
        compiler_params=pltpu.CompilerParams(
            # Leading split axis is independent (sharded across TCs on v7x);
            # node-tile axis is the reduction.
            dimension_semantics=("parallel", "arbitrary"),
            vmem_limit_bytes=48 * 1024 * 1024),
    )(node_f32, seg_p, jnp.asarray(offset_row), jnp.asarray(expand_s),
      jnp.asarray(expand), jnp.asarray(reduce_m), w_blocked)

    # Tiny epilogue: sum the per-split pre-activation partials, then bias+tanh
    # (tanh must come after the cross-split sum), slice off graph padding.
    g_pre = partials.sum(axis=0)[:num_graphs]
    return jnp.tanh(g_pre + bias.astype(jnp.float32)[None, :])


def weave_gather_reference(node_feats, segment_ids, num_graphs,
                           w_interleaved_T, bias):
    """Pure-JAX reference mirroring the torch code exactly (interleaved layout)."""
    means = jnp.asarray(GAUSSIAN_MEANS, jnp.float32)
    stds = jnp.asarray(GAUSSIAN_STDS, jnp.float32)
    v, d = node_feats.shape
    x3 = node_feats[:, :, None]                               # (V, D, 1)
    log_p = -0.5 * ((x3 - means) / stds) ** 2                 # (V, D, K)
    probs = jnp.exp(log_p) + 1e-7
    probs = probs / probs.sum(axis=2, keepdims=True)
    h = probs.reshape(v, d * K)                               # interleaved cols
    g = jax.ops.segment_sum(h, segment_ids, num_segments=num_graphs)
    return jnp.tanh(g @ w_interleaved_T + bias)


if __name__ == "__main__":
    def run_case(key, v, d, g, tile_v):
        k1, k2, k3, k4 = jax.random.split(key, 4)
        node_feats = jax.random.normal(k1, (v, d), dtype=jnp.float32)
        segment_ids = jnp.sort(jax.random.randint(k4, (v,), 0, g)).astype(jnp.int32)
        # nn.Linear(D*K, D): weight (D, D*K), bias (D). We carry its transpose
        # (D*K, D) with torch's interleaved row order row = d*K + k.
        w_interleaved_T = (jax.random.normal(k2, (d * K, d), dtype=jnp.float32)
                           * (1.0 / np.sqrt(d * K)))
        bias = jax.random.normal(k3, (d,), dtype=jnp.float32) * 0.01

        out = weave_gather(node_feats, segment_ids, num_graphs=g,
                           w_interleaved_T=w_interleaved_T, bias=bias,
                           tile_v=tile_v)
        out = jax.block_until_ready(out)
        ref = weave_gather_reference(node_feats, segment_ids, g,
                                     w_interleaved_T, bias)
        assert out.shape == (g, d)
        err = float(jnp.max(jnp.abs(out - ref)))
        assert err < 1e-4, f"max abs err = {err}"

    key = jax.random.PRNGKey(0)
    ka, kb, kc = jax.random.split(key, 3)
    # Single-tile case (default tile), multi-tile ragged case (odd tile count ->
    # exercises clamping + masking + 2-way split), and 1-tile-per-split case.
    run_case(ka, v=16, d=32, g=4, tile_v=2048)
    run_case(kb, v=300, d=32, g=6, tile_v=128)
    run_case(kc, v=129, d=32, g=3, tile_v=128)
    print("KERNEL_OK")
</pallas_src>

<mosaic_0001>
module attributes {stable_mosaic.version = 11 : i64} {
  func.func @_weave_gather_kernel(%arg0: i32, %arg1: i32, %arg2: memref<16x32xf32, #tpu.memory_space<vmem>>, %arg3: memref<1x16xi32, #tpu.memory_space<vmem>>, %arg4: memref<1x352xf32, #tpu.memory_space<vmem>>, %arg5: memref<32x352xf32, #tpu.memory_space<vmem>>, %arg6: memref<32x352xf32, #tpu.memory_space<vmem>>, %arg7: memref<352x32xf32, #tpu.memory_space<vmem>>, %arg8: memref<352x32xf32, #tpu.memory_space<vmem>>, %arg9: memref<1x8x32xf32, #tpu.memory_space<vmem>>, %arg10: memref<8x352xf32, #tpu.memory_space<vmem>>) attributes {dimension_semantics = [#tpu.dimension_semantics<parallel>, #tpu.dimension_semantics<arbitrary>], iteration_bounds = array<i64: 1, 1>, scalar_prefetch = 0 : i64, scratch_operands = 1 : i64, tpu.core_type = #tpu.core_type<tc>, window_params = [{transform_indices = @transform_0, window_bounds = array<i64: 16, 32>}, {transform_indices = @transform_1, window_bounds = array<i64: 1, 16>}, {pipeline_mode = #tpu.pipeline_mode<synchronous>, transform_indices = @transform_2, window_bounds = array<i64: 1, 352>}, {pipeline_mode = #tpu.pipeline_mode<synchronous>, transform_indices = @transform_3, window_bounds = array<i64: 32, 352>}, {pipeline_mode = #tpu.pipeline_mode<synchronous>, transform_indices = @transform_4, window_bounds = array<i64: 32, 352>}, {pipeline_mode = #tpu.pipeline_mode<synchronous>, transform_indices = @transform_5, window_bounds = array<i64: 352, 32>}, {pipeline_mode = #tpu.pipeline_mode<synchronous>, transform_indices = @transform_6, window_bounds = array<i64: 352, 32>}, {transform_indices = @transform_7, window_bounds = array<i64: 1, 8, 32>}]} {
    %c0_i32 = arith.constant 0 : i32
    %0 = arith.cmpi eq, %arg1, %c0_i32 : i32
    %1 = arith.extui %0 : i1 to i32
    %c0_i32_0 = arith.constant 0 : i32
    %2 = arith.cmpi ne, %1, %c0_i32_0 : i32
    scf.if %2 {
      %cst_26 = arith.constant 0.000000e+00 : f32
      %50 = vector.broadcast %cst_26 : f32 to vector<8x352xf32>
      %c0_27 = arith.constant 0 : index
      %c0_28 = arith.constant 0 : index
      %51 = vector.load %arg10[%c0_27, %c0_28] : memref<8x352xf32, #tpu.memory_space<vmem>>, vector<8x352xf32>
      tpu.vector_store %arg10[%c0_27, %c0_28], %50 {strides = array<i32>} : memref<8x352xf32, #tpu.memory_space<vmem>>, vector<8x352xf32>,
    } else {
    }
    %c1_i32 = arith.constant 1 : i32
    %3 = arith.muli %arg0, %c1_i32 : i32
    %4 = arith.addi %3, %arg1 : i32
    %c16_i32 = arith.constant 16 : i32
    %5 = arith.muli %4, %c16_i32 : i32
    %6 = tpu.iota {dimensions = array<i32: 0>} : vector<16x1xi32>
    %7 = vector.broadcast %5 : i32 to vector<16x1xi32>
    %8 = arith.addi %7, %6 : vector<16x1xi32>
    %c16_i32_1 = arith.constant 16 : i32
    %9 = vector.broadcast %c16_i32_1 : i32 to vector<16x1xi32>
    %10 = arith.cmpi slt, %8, %9 : vector<16x1xi32>
    %c0 = arith.constant 0 : index
    %c0_2 = arith.constant 0 : index
    %11 = vector.load %arg2[%c0, %c0_2] : memref<16x32xf32, #tpu.memory_space<vmem>>, vector<16x32xf32>
    %cst = arith.constant 0.000000e+00 : f32
    %12 = vector.shape_cast %10 : vector<16x1xi1> to vector<16x1xi1>
    %13 = vector.broadcast %12 : vector<16x1xi1> to vector<16x32xi1>
    %14 = vector.broadcast %cst : f32 to vector<16x32xf32>
    %15 = arith.select %13, %11, %14 : vector<16x32xi1>, vector<16x32xf32>
    %c0_3 = arith.constant 0 : index
    %c0_4 = arith.constant 0 : index
    %16 = vector.load %arg5[%c0_3, %c0_4] : memref<32x352xf32, #tpu.memory_space<vmem>>, vector<32x352xf32>
    %cst_5 = arith.constant dense<0.000000e+00> : vector<16x352xf32>
    %17 = tpu.matmul %15, %16, %cst_5 {dimension_numbers = #tpu.dot_dimension_numbers<[1], [0], [0], [1], [0, 0, 1, 1], [], []>} : vector<16x32xf32>, vector<32x352xf32>, vector<16x352xf32> -> vector<16x352xf32>
    %c0_6 = arith.constant 0 : index
    %c0_7 = arith.constant 0 : index
    %18 = vector.load %arg4[%c0_6, %c0_7] : memref<1x352xf32, #tpu.memory_space<vmem>>, vector<1x352xf32>
    %19 = vector.broadcast %18 : vector<1x352xf32> to vector<16x352xf32>
    %20 = arith.subf %17, %19 : vector<16x352xf32>
    %21 = arith.mulf %20, %20 : vector<16x352xf32>
    %cst_8 = arith.constant 0.000000e+00 : f32
    %22 = vector.broadcast %cst_8 : f32 to vector<16x352xf32>
    %23 = arith.subf %22, %21 : vector<16x352xf32>
    %24 = math.exp %23 : vector<16x352xf32>
    %cst_9 = arith.constant 1.000000e-07 : f32
    %25 = vector.broadcast %cst_9 : f32 to vector<16x352xf32>
    %26 = arith.addf %24, %25 : vector<16x352xf32>
    %c0_10 = arith.constant 0 : index
    %c0_11 = arith.constant 0 : index
    %27 = vector.load %arg7[%c0_10, %c0_11] : memref<352x32xf32, #tpu.memory_space<vmem>>, vector<352x32xf32>
    %cst_12 = arith.constant dense<0.000000e+00> : vector<16x32xf32>
    %28 = tpu.matmul %26, %27, %cst_12 {dimension_numbers = #tpu.dot_dimension_numbers<[1], [0], [0], [1], [0, 0, 1, 1], [], []>} : vector<16x352xf32>, vector<352x32xf32>, vector<16x32xf32> -> vector<16x32xf32>
    %29 = tpu.reciprocal %28 {approx = true} : vector<16x32xf32> -> vector<16x32xf32>
    %30 = arith.mulf %28, %29 : vector<16x32xf32>
    %cst_13 = arith.constant 2.000000e+00 : f32
    %31 = vector.broadcast %cst_13 : f32 to vector<16x32xf32>
    %32 = arith.subf %31, %30 : vector<16x32xf32>
    %33 = arith.mulf %29, %32 : vector<16x32xf32>
    %c0_14 = arith.constant 0 : index
    %c0_15 = arith.constant 0 : index
    %34 = vector.load %arg6[%c0_14, %c0_15] : memref<32x352xf32, #tpu.memory_space<vmem>>, vector<32x352xf32>
    %cst_16 = arith.constant dense<0.000000e+00> : vector<16x352xf32>
    %35 = tpu.matmul %33, %34, %cst_16 {dimension_numbers = #tpu.dot_dimension_numbers<[1], [0], [0], [1], [0, 0, 1, 1], [], []>} : vector<16x32xf32>, vector<32x352xf32>, vector<16x352xf32> -> vector<16x352xf32>
    %36 = arith.mulf %26, %35 : vector<16x352xf32>
    %c0_17 = arith.constant 0 : index
    %c0_18 = arith.constant 0 : index
    %37 = vector.load %arg3[%c0_17, %c0_18] : memref<1x16xi32, #tpu.memory_space<vmem>>, vector<1x16xi32>
    %38 = tpu.iota {dimensions = array<i32: 0>} : vector<8x16xi32>
    %39 = vector.broadcast %37 : vector<1x16xi32> to vector<8x16xi32>
    %40 = arith.cmpi eq, %38, %39 : vector<8x16xi32>
    %41 = arith.extui %40 : vector<8x16xi1> to vector<8x16xi32>
    %42 = arith.sitofp %41 : vector<8x16xi32> to vector<8x16xf32>
    %c0_19 = arith.constant 0 : index
    %c0_20 = arith.constant 0 : index
    %43 = vector.load %arg10[%c0_19, %c0_20] : memref<8x352xf32, #tpu.memory_space<vmem>>, vector<8x352xf32>
    %cst_21 = arith.constant dense<0.000000e+00> : vector<8x352xf32>
    %44 = tpu.matmul %42, %36, %cst_21 {dimension_numbers = #tpu.dot_dimension_numbers<[1], [0], [0], [1], [0, 0, 1, 1], [], []>} : vector<8x16xf32>, vector<16x352xf32>, vector<8x352xf32> -> vector<8x352xf32>
    %45 = arith.addf %43, %44 : vector<8x352xf32>
    %c0_22 = arith.constant 0 : index
    %c0_23 = arith.constant 0 : index
    %46 = vector.load %arg10[%c0_22, %c0_23] : memref<8x352xf32, #tpu.memory_space<vmem>>, vector<8x352xf32>
    tpu.vector_store %arg10[%c0_22, %c0_23], %45 {strides = array<i32>} : memref<8x352xf32, #tpu.memory_space<vmem>>, vector<8x352xf32>,
    %c0_i32_24 = arith.constant 0 : i32
    %47 = arith.cmpi eq, %arg1, %c0_i32_24 : i32
    %48 = arith.extui %47 : i1 to i32
    %c0_i32_25 = arith.constant 0 : i32
    %49 = arith.cmpi ne, %48, %c0_i32_25 : i32
    scf.if %49 {
      %c0_26 = arith.constant 0 : index
      %c0_27 = arith.constant 0 : index
      %50 = vector.load %arg10[%c0_26, %c0_27] : memref<8x352xf32, #tpu.memory_space<vmem>>, vector<8x352xf32>
      %c0_28 = arith.constant 0 : index
      %c0_29 = arith.constant 0 : index
      %51 = vector.load %arg8[%c0_28, %c0_29] : memref<352x32xf32, #tpu.memory_space<vmem>>, vector<352x32xf32>
      %cst_30 = arith.constant dense<0.000000e+00> : vector<8x32xf32>
      %52 = tpu.matmul %50, %51, %cst_30 {dimension_numbers = #tpu.dot_dimension_numbers<[1], [0], [0], [1], [0, 0, 1, 1], [], []>} : vector<8x352xf32>, vector<352x32xf32>, vector<8x32xf32> -> vector<8x32xf32>
      %53 = vector.shape_cast %52 : vector<8x32xf32> to vector<1x8x32xf32>
      %c0_31 = arith.constant 0 : index
      %c0_32 = arith.constant 0 : index
      %c0_33 = arith.constant 0 : index
      %54 = vector.load %arg9[%c0_31, %c0_32, %c0_33] : memref<1x8x32xf32, #tpu.memory_space<vmem>>, vector<1x8x32xf32>
      tpu.vector_store %arg9[%c0_31, %c0_32, %c0_33], %53 {strides = array<i32>} : memref<1x8x32xf32, #tpu.memory_space<vmem>>, vector<1x8x32xf32>,
    } else {
    }
    return
  }
  func.func @transform_0(%arg0: i32, %arg1: i32) -> (i32, i32) {
    %c1_i32 = arith.constant 1 : i32
    %0 = arith.muli %arg0, %c1_i32 : i32
    %1 = arith.addi %0, %arg1 : i32
    %c0_i32 = arith.constant 0 : i32
    %2 = arith.minsi %1, %c0_i32 : i32
    %c0_i32_0 = arith.constant 0 : i32
    %c0_i32_1 = arith.constant 0 : i32
    return %2, %c0_i32_0 : i32, i32
  }
  func.func @transform_1(%arg0: i32, %arg1: i32) -> (i32, i32) {
    %c1_i32 = arith.constant 1 : i32
    %0 = arith.muli %arg0, %c1_i32 : i32
    %1 = arith.addi %0, %arg1 : i32
    %c0_i32 = arith.constant 0 : i32
    %c0_i32_0 = arith.constant 0 : i32
    return %c0_i32, %1 : i32, i32
  }
  func.func @transform_2(%arg0: i32, %arg1: i32) -> (i32, i32) {
    %c0_i32 = arith.constant 0 : i32
    %c0_i32_0 = arith.constant 0 : i32
    %c0_i32_1 = arith.constant 0 : i32
    return %c0_i32, %c0_i32_0 : i32, i32
  }
  func.func @transform_3(%arg0: i32, %arg1: i32) -> (i32, i32) {
    %c0_i32 = arith.constant 0 : i32
    %c0_i32_0 = arith.constant 0 : i32
    %c0_i32_1 = arith.constant 0 : i32
    return %c0_i32, %c0_i32_0 : i32, i32
  }
  func.func @transform_4(%arg0: i32, %arg1: i32) -> (i32, i32) {
    %c0_i32 = arith.constant 0 : i32
    %c0_i32_0 = arith.constant 0 : i32
    %c0_i32_1 = arith.constant 0 : i32
    return %c0_i32, %c0_i32_0 : i32, i32
  }
  func.func @transform_5(%arg0: i32, %arg1: i32) -> (i32, i32) {
    %c0_i32 = arith.constant 0 : i32
    %c0_i32_0 = arith.constant 0 : i32
    %c0_i32_1 = arith.constant 0 : i32
    return %c0_i32, %c0_i32_0 : i32, i32
  }
  func.func @transform_6(%arg0: i32, %arg1: i32) -> (i32, i32) {
    %c0_i32 = arith.constant 0 : i32
    %c0_i32_0 = arith.constant 0 : i32
    %c0_i32_1 = arith.constant 0 : i32
    return %c0_i32, %c0_i32_0 : i32, i32
  }
  func.func @transform_7(%arg0: i32, %arg1: i32) -> (i32, i32, i32) {
    %c0_i32 = arith.constant 0 : i32
    %c0_i32_0 = arith.constant 0 : i32
    %c0_i32_1 = arith.constant 0 : i32
    return %arg0, %c0_i32, %c0_i32_0 : i32, i32, i32
  }
}

</mosaic_0001>

<llo_original>
// kernel: weave_gather.1
$region0: #{weave_gather.1}
  #allocation0 [shape = 'u32[]', space=smem, size = 0x4, offset = 0x4, fixed_abs, tag = 'smem constant byte address 0x4 - core index']
  #allocation1 [shape = 'u32[144,128]{1,0:T(1,128)}', space=vmem, size = 0x12000, scoped, tag = 'internal scratch']
  #allocation2 [shape = 'f32[8,352]{1,0:T(8,128)}', space=vmem, size = 0x3000, scoped, tag = 'scratch operand']
  %s0 = inlined_call_operand.vmem [shape: f32[16,32], index: 0, kind: input, shape index: {}]
  %s1 = inlined_call_operand.vmem [shape: s32[1,16], index: 1, kind: input, shape index: {}]
  %s2 = inlined_call_operand.vmem [shape: f32[1,352], index: 2, kind: input, shape index: {}]
  %s3 = inlined_call_operand.vmem [shape: f32[32,352], index: 3, kind: input, shape index: {}]
  %s4 = inlined_call_operand.vmem [shape: f32[32,352], index: 4, kind: input, shape index: {}]
  %s5 = inlined_call_operand.vmem [shape: f32[352,32], index: 5, kind: input, shape index: {}]
  %s6 = inlined_call_operand.vmem [shape: f32[352,32], index: 6, kind: input, shape index: {}]
  %s7 = inlined_call_operand.vmem [shape: f32[1,8,32], index: 7, kind: output, shape index: {}]
  %s8 = sld [smem:[#allocation0]]
  $region46: #{weave_gather.1} parent=0
    _
  %s10 = ssub.s32 1, %s8
  %s11 = scalar_select 0, %s10, %s8
  // Predicated region
  $region2: #{weave_gather.1} parent=0 // pred_check
    _
  $region3: #{weave_gather.1} parent=0 // pred_check_branch
    %13 = sbr.rel (0) target = $region5
  $region4: #{weave_gather.1} parent=0 // pred_region
    %s14 = sadd.s32 0, 0
    %p15 = scmp.lt.s32.totalorder %s14, 0
    %s16 = scalar_select %p15, %s14, 0
    %s17 = smul.u32 2, %s16
    %p18 = scmp.lt.s32.totalorder %s17, 1
    %s19 = scalar_select %p18, %s17, 1
    %s20 = smul.addr %s19, 8
    %s21 = scalar_lea.vmem %s0, %s20
    %s22 = sadd.s32 0, 0
    %p23 = scmp.lt.s32.totalorder %s22, 0
    %s24 = scalar_select %p23, %s22, 0
    %s25 = smul.u32 2, %s24
  $region5: #{weave_gather.1} parent=0 // pred_fallthru
    _
  // Predicated region
  $region6: #{weave_gather.1} parent=0 // pred_check
    _
  $region7: #{weave_gather.1} parent=0 // pred_check_branch
    %27 = sbr.rel (0) target = $region9
  $region8: #{weave_gather.1} parent=0 // pred_region
    %s28 = sadd.s32 0, 0
    %p29 = scmp.lt.s32.totalorder %s28, 0
    %s30 = scalar_select %p29, %s28, 0
    %s31 = scalar_lea.vmem %s1, %s30
    %s32 = sadd.s32 0, 0
  $region9: #{weave_gather.1} parent=0 // pred_fallthru
    _
  // Predicated region
  $region10: #{weave_gather.1} parent=0 // pred_check
    _
  $region11: #{weave_gather.1} parent=0 // pred_check_branch
    %34 = sbr.rel (0) target = $region13
  $region12: #{weave_gather.1} parent=0 // pred_region
    _
  $region13: #{weave_gather.1} parent=0 // pred_fallthru
    _
  // Predicated region
  $region14: #{weave_gather.1} parent=0 // pred_check
    _
  $region15: #{weave_gather.1} parent=0 // pred_check_branch
    %36 = sbr.rel (0) target = $region17
  $region16: #{weave_gather.1} parent=0 // pred_region
    _
  $region17: #{weave_gather.1} parent=0 // pred_fallthru
    _
  // Predicated region
  $region18: #{weave_gather.1} parent=0 // pred_check
    _
  $region19: #{weave_gather.1} parent=0 // pred_check_branch
    %38 = sbr.rel (0) target = $region21
  $region20: #{weave_gather.1} parent=0 // pred_region
    _
  $region21: #{weave_gather.1} parent=0 // pred_fallthru
    _
  // Predicated region
  $region22: #{weave_gather.1} parent=0 // pred_check
    _
  $region23: #{weave_gather.1} parent=0 // pred_check_branch
    %40 = sbr.rel (0) target = $region25
  $region24: #{weave_gather.1} parent=0 // pred_region
    _
  $region25: #{weave_gather.1} parent=0 // pred_fallthru
    _
  // Predicated region
  $region26: #{weave_gather.1} parent=0 // pred_check
    _
  $region27: #{weave_gather.1} parent=0 // pred_check_branch
    %42 = sbr.rel (0) target = $region29
  $region28: #{weave_gather.1} parent=0 // pred_region
    _
  $region29: #{weave_gather.1} parent=0 // pred_fallthru
    _
  %s43 = sadd.s32 0, 0
  %p44 = scmp.lt.s32.totalorder %s43, 0
  %s45 = scalar_select %p44, %s43, 0
  %s46 = smul.u32 2, %s45
  %p47 = scmp.lt.s32.totalorder %s46, 1
  %s48 = scalar_select %p47, %s46, 1
  %s49 = smul.addr %s48, 8
  %s50 = scalar_lea.vmem %s0, %s49
  %s51 = sadd.s32 0, 0
  %p52 = scmp.lt.s32.totalorder %s51, 0
  %s53 = scalar_select %p52, %s51, 0
  %s54 = scalar_lea.vmem %s1, %s53
  %s55 = sadd.s32 0, 0
  %p56 = scmp.lt.s32.totalorder %s55, 0
  %s57 = scalar_select %p56, %s55, 0
  %s58 = smul.u32 2, %s57
  %p59 = scmp.lt.s32.totalorder %s58, 1
  %s60 = scalar_select %p59, %s58, 1
  %s61 = smul.addr %s60, 8
  %s62 = scalar_lea.vmem %s0, %s61
  %s63 = sadd.s32 0, 0
  %p64 = scmp.lt.s32.totalorder %s63, 0
  %s65 = scalar_select %p64, %s63, 0
  %s66 = smul.u32 2, %s65
  %s67 = sadd.s32 0, 0
  %p68 = scmp.lt.s32.totalorder %s67, 0
  %s69 = scalar_select %p68, %s67, 0
  %s70 = scalar_lea.vmem %s1, %s69
  %s71 = sadd.s32 0, 0
  %p72 = scmp.eq.s32.totalorder 0, 0
  // Predicated region
  $region30: #{weave_gather.1} parent=0 // pred_check
    %p73 = pneg %p72
  $region31: #{weave_gather.1} parent=0 // pred_check_branch
    %75 = sbr.rel (%p73) target = $region33
  $region32: #{weave_gather.1} parent=0 // pred_region
    %76 = vst [vmem:[#allocation2] sm:$0xff] 0.0
    %77 = vst [vmem:[#allocation2 + $0x8] sm:$0xff] 0.0
    %vm78 = vcmask 785408
    %79 = vst.msk [vmem:[#allocation2 + $0x10] sm:$0xff] %vm78, 0.0
  $region33: #{weave_gather.1} parent=0 // pred_fallthru
    _
  %s80 = sadd.s32 0, 0
  %s81 = smul.u32 %s80, 16
  %v82 = vlaneseq
  %v83 = vshrl.u32 %v82, 7
  %v84 = vadd.s32 %v83, 8
  %v85 = vstv %s81
  %v86 = vadd.s32 %v85, %v83
  %v87 = vadd.s32 %v85, %v84
  %vm88 = vcmp.lt.s32.totalorder %v86, 16
  %vm89 = vcmp.lt.s32.totalorder %v87, 16
  %v90 = vld [vmem:[%s62] sm:$0xff]
  %v91 = vld [vmem:[%s62 + $0x8] sm:$0xff]
  %v92 = vsel %vm88, 1, 0
  %v93 = vsel %vm89, 1, 0
  %vm94 = vcmp.eq.s32.totalorder %v92, 1
  %vm95 = vcmp.eq.s32.totalorder %v93, 1
  %v96 = vsel %vm94, %v90, 0.0
  %v97 = vsel %vm95, %v91, 0.0
  %v98 = vld [vmem:[%s3] sm:$0xff]
  %v99 = vld [vmem:[%s3 + $0x8] sm:$0xff]
  %v100 = vld [vmem:[%s3 + $0x10] sm:$0xff]
  %v101 = vld [vmem:[%s3 + $0x18] sm:$0xff]
  %v102 = vld [vmem:[%s3 + $0x20] sm:$0xff]
  %v103 = vld [vmem:[%s3 + $0x28] sm:$0xff]
  %v104 = vld [vmem:[%s3 + $0x30] sm:$0xff]
  %v105 = vld [vmem:[%s3 + $0x38] sm:$0xff]
  %v106 = vld [vmem:[%s3 + $0x40] sm:$0xff]
  %v107 = vld [vmem:[%s3 + $0x48] sm:$0xff]
  %v108 = vld [vmem:[%s3 + $0x50] sm:$0xff]
  %v109 = vld [vmem:[%s3 + $0x58] sm:$0xff]
  %vm110 = vcmask 261120
  %v112 = vsel %vm110, %v96, 0
  %v115 = vsel %vm110, %v97, 0
  %117 = vmatprep.subr.mxu0 %v99
  %118 = vmatpush1.msra.mxu0 %v98
  %119 = vmatprep.subr.mxu0 %v102
  %120 = vmatpush1.msra.mxu0 %v101
  %121 = vmatprep.subr.mxu0 %v105
  %122 = vmatpush1.msra.mxu0 %v104
  %123 = vmatprep.subr.mxu0 %v108
  %124 = vmatpush1.msra.mxu0 %v107
  %125 = vmatprep.subr.mxu0 0.0
  %126 = vmatpush1.msra.mxu0 0.0
  %127 = vmatprep.subr.mxu0 0.0
  %128 = vmatpush1.msra.mxu0 0.0
  %129 = vmatprep.subr.mxu0 0.0
  %130 = vmatpush1.msra.mxu0 0.0
  %131 = vmatprep.subr.mxu0 0.0
  %132 = vmatpush1.msra.mxu0 0.0
  %133 = vmatprep.subr.mxu0 0.0
  %134 = vmatpush1.msra.mxu0 0.0
  %135 = vmatprep.subr.mxu0 0.0
  %136 = vmatpush1.msra.mxu0 0.0
  %137 = vmatprep.subr.mxu0 0.0
  %138 = vmatpush1.msra.mxu0 0.0
  %139 = vmatprep.subr.mxu0 0.0
  %140 = vmatpush1.msra.mxu0 0.0
  %141 = vmatprep.subr.mxu0 0.0
  %142 = vmatpush1.msra.mxu0 0.0
  %143 = vmatprep.subr.mxu0 0.0
  %144 = vmatpush1.msra.mxu0 0.0
  %145 = vmatprep.subr.mxu0 0.0
  %146 = vmatpush1.msra.mxu0 0.0
  %147 = vmatprep.subr.mxu0 0.0
  %148 = vmatpush1.msra.mxu0 0.0
  %149 = vmatprep.subr.mxu0 0.0
  %150 = vmatpush1.msra.mxu0 0.0
  %151 = vmatprep.subr.mxu0 0.0
  %152 = vmatpush1.msra.mxu0 0.0
  %153 = vmatprep.subr.mxu0 0.0
  %154 = vmatpush1.msra.mxu0 0.0
  %155 = vmatprep.subr.mxu0 0.0
  %156 = vmatpush1.msra.mxu0 0.0
  %157 = vmatprep.subr.mxu0 0.0
  %158 = vmatpush1.msra.mxu0 0.0
  %159 = vmatprep.subr.mxu0 0.0
  %160 = vmatpush1.msra.mxu0 0.0
  %161 = vmatprep.subr.mxu0 0.0
  %162 = vmatpush1.msra.mxu0 0.0
  %163 = vmatprep.subr.mxu0 0.0
  %164 = vmatpush1.msra.mxu0 0.0
  %165 = vmatprep.subr.mxu0 0.0
  %166 = vmatpush1.msra.mxu0 0.0
  %167 = vmatprep.subr.mxu0 0.0
  %168 = vmatpush1.msra.mxu0 0.0
  %169 = vmatprep.subr.mxu0 0.0
  %170 = vmatpush1.msra.mxu0 0.0
  %171 = vmatprep.subr.mxu0 0.0
  %172 = vmatpush1.msra.mxu0 0.0
  %173 = vmatprep.subr.mxu0 0.0
  %174 = vmatpush1.msra.mxu0 0.0
  %175 = vmatprep.subr.mxu0 0.0
  %176 = vmatpush1.msra.mxu0 0.0
  %177 = vmatprep.subr.mxu0 0.0
  %178 = vmatpush1.msra.mxu0 0.0
  %179 = vmatprep.subr.mxu0 0.0
  %180 = vmatpush1.msra.mxu0 0.0
  %181 = vmatprep.mubr.f32.mxu0 0.0
  %182 = vmatmul.mubr.f32.gmra.mrb[0].mxu0 %v112
  %v183 = vpop.f32.mrb[0].mxu0
  %v184 = vadd.f32 0.0, %v183
  %v185 = vpop.f32.mrb[0].mxu0
  %v186 = vadd.f32 0.0, %v185
  %187 = vmatprep.mubr.f32.mxu0 0.0
  %188 = vmatmul.mubr.f32.gmra.mrb[0].mxu0 %v115
  %v189 = vpop.f32.mrb[0].mxu0
  %v190 = vadd.f32 0.0, %v189
  %v191 = vpop.f32.mrb[0].mxu0
  %v192 = vadd.f32 0.0, %v191
  %193 = vdwg.mxu0
  %194 = vmatprep.subr.mxu0 0.0
  %195 = vmatpush1.msra.mxu0 %v100
  %196 = vmatprep.subr.mxu0 0.0
  %197 = vmatpush1.msra.mxu0 %v103
  %198 = vmatprep.subr.mxu0 0.0
  %199 = vmatpush1.msra.mxu0 %v106
  %200 = vmatprep.subr.mxu0 0.0
  %201 = vmatpush1.msra.mxu0 %v109
  %202 = vmatprep.subr.mxu0 0.0
  %203 = vmatpush1.msra.mxu0 0.0
  %204 = vmatprep.subr.mxu0 0.0
  %205 = vmatpush1.msra.mxu0 0.0
  %206 = vmatprep.subr.mxu0 0.0
  %207 = vmatpush1.msra.mxu0 0.0
  %208 = vmatprep.subr.mxu0 0.0
  %209 = vmatpush1.msra.mxu0 0.0
  %210 = vmatprep.subr.mxu0 0.0
  %211 = vmatpush1.msra.mxu0 0.0
  %212 = vmatprep.subr.mxu0 0.0
  %213 = vmatpush1.msra.mxu0 0.0
  %214 = vmatprep.subr.mxu0 0.0
  %215 = vmatpush1.msra.mxu0 0.0
  %216 = vmatprep.subr.mxu0 0.0
  %217 = vmatpush1.msra.mxu0 0.0
  %218 = vmatprep.subr.mxu0 0.0
  %219 = vmatpush1.msra.mxu0 0.0
  %220 = vmatprep.subr.mxu0 0.0
  %221 = vmatpush1.msra.mxu0 0.0
  %222 = vmatprep.subr.mxu0 0.0
  %223 = vmatpush1.msra.mxu0 0.0
  %224 = vmatprep.subr.mxu0 0.0
  %225 = vmatpush1.msra.mxu0 0.0
  %226 = vmatprep.subr.mxu0 0.0
  %227 = vmatpush1.msra.mxu0 0.0
  %228 = vmatprep.subr.mxu0 0.0
  %229 = vmatpush1.msra.mxu0 0.0
  %230 = vmatprep.subr.mxu0 0.0
  %231 = vmatpush1.msra.mxu0 0.0
  %232 = vmatprep.subr.mxu0 0.0
  %233 = vmatpush1.msra.mxu0 0.0
  %234 = vmatprep.subr.mxu0 0.0
  %235 = vmatpush1.msra.mxu0 0.0
  %236 = vmatprep.subr.mxu0 0.0
  %237 = vmatpush1.msra.mxu0 0.0
  %238 = vmatprep.subr.mxu0 0.0
  %239 = vmatpush1.msra.mxu0 0.0
  %240 = vmatprep.subr.mxu0 0.0
  %241 = vmatpush1.msra.mxu0 0.0
  %242 = vmatprep.subr.mxu0 0.0
  %243 = vmatpush1.msra.mxu0 0.0
  %244 = vmatprep.subr.mxu0 0.0
  %245 = vmatpush1.msra.mxu0 0.0
  %246 = vmatprep.subr.mxu0 0.0
  %247 = vmatpush1.msra.mxu0 0.0
  %248 = vmatprep.subr.mxu0 0.0
  %249 = vmatpush1.msra.mxu0 0.0
  %250 = vmatprep.subr.mxu0 0.0
  %251 = vmatpush1.msra.mxu0 0.0
  %252 = vmatprep.subr.mxu0 0.0
  %253 = vmatpush1.msra.mxu0 0.0
  %254 = vmatprep.subr.mxu0 0.0
  %255 = vmatpush1.msra.mxu0 0.0
  %256 = vmatprep.subr.mxu0 0.0
  %257 = vmatpush1.msra.mxu0 0.0
  %258 = vmatprep.mubr.f32.mxu0 0.0
  %259 = vmatmul.mubr.f32.gmra.mrb[0].mxu0 %v112
  %v260 = vpop.f32.mrb[0].mxu0
  %v261 = vadd.f32 0.0, %v260
  %v262 = vpop.f32.mrb[0].mxu0
  %263 = vmatprep.mubr.f32.mxu0 0.0
  %264 = vmatmul.mubr.f32.gmra.mrb[0].mxu0 %v115
  %v265 = vpop.f32.mrb[0].mxu0
  %v266 = vadd.f32 0.0, %v265
  %v267 = vpop.f32.mrb[0].mxu0
  %268 = vdwg.mxu0
  %v269 = vld [vmem:[%s2] sm:$0x7]
  %v271 = vlaneseq
  %v272 = vshrl.u32 %v271, 7
  %v273 = vsub.s32 0, %v272
  %v274 = vrot.slane %v269, %v273
  %v275 = vlaneseq
  %v276 = vshrl.u32 %v275, 7
  %v277 = vsub.s32 1, %v276
  %v278 = vrot.slane %v269, %v277
  %v279 = vlaneseq
  %v280 = vshrl.u32 %v279, 7
  %v281 = vsub.s32 2, %v280
  %v282 = vrot.slane %v269, %v281
  %v286 = vsub.f32 %v184, %v274
  %v287 = vsub.f32 %v186, %v278
  %v288 = vsub.f32 %v261, %v282
  %v289 = vsub.f32 %v190, %v274
  %v290 = vsub.f32 %v192, %v278
  %v291 = vsub.f32 %v266, %v282
  %v292 = vmul.f32 %v286, %v286
  %v293 = vmul.f32 %v287, %v287
  %v294 = vmul.f32 %v288, %v288
  %v295 = vmul.f32 %v289, %v289
  %v296 = vmul.f32 %v290, %v290
  %v297 = vmul.f32 %v291, %v291
  %v298 = vsub.f32 0.0, %v292
  %v299 = vsub.f32 0.0, %v293
  %v300 = vsub.f32 0.0, %v294
  %v301 = vsub.f32 0.0, %v295
  %v302 = vsub.f32 0.0, %v296
  %v303 = vsub.f32 0.0, %v297
  %v304 = vmul.f32 %v298, 1.442695
  %v305 = vpow.pop %v304
  %v306 = vmul.f32 %v299, 1.442695
  %v307 = vpow.pop %v306
  %v308 = vmul.f32 %v300, 1.442695
  %v309 = vpow.pop %v308
  %v310 = vmul.f32 %v301, 1.442695
  %v311 = vpow.pop %v310
  %v312 = vmul.f32 %v302, 1.442695
  %v313 = vpow.pop %v312
  %v314 = vmul.f32 %v303, 1.442695
  %v315 = vpow.pop %v314
  %v316 = vadd.f32 %v305, 1e-07
  %v317 = vadd.f32 %v307, 1e-07
  %v318 = vadd.f32 %v309, 1e-07
  %v319 = vadd.f32 %v311, 1e-07
  %v320 = vadd.f32 %v313, 1e-07
  %v321 = vadd.f32 %v315, 1e-07
  %v322 = vld [vmem:[%s5] sm:$0xff]
  %v323 = vld [vmem:[%s5 + $0x8] sm:$0xff]
  %v324 = vld [vmem:[%s5 + $0x10] sm:$0xff]
  %v325 = vld [vmem:[%s5 + $0x18] sm:$0xff]
  %v326 = vld [vmem:[%s5 + $0x20] sm:$0xff]
  %v327 = vld [vmem:[%s5 + $0x28] sm:$0xff]
  %v328 = vld [vmem:[%s5 + $0x30] sm:$0xff]
  %v329 = vld [vmem:[%s5 + $0x38] sm:$0xff]
  %v330 = vld [vmem:[%s5 + $0x40] sm:$0xff]
  %v331 = vld [vmem:[%s5 + $0x48] sm:$0xff]
  %v332 = vld [vmem:[%s5 + $0x50] sm:$0xff]
  %v333 = vld [vmem:[%s5 + $0x58] sm:$0xff]
  %v334 = vld [vmem:[%s5 + $0x60] sm:$0xff]
  %v335 = vld [vmem:[%s5 + $0x68] sm:$0xff]
  %v336 = vld [vmem:[%s5 + $0x70] sm:$0xff]
  %v337 = vld [vmem:[%s5 + $0x78] sm:$0xff]
  %v338 = vld [vmem:[%s5 + $0x80] sm:$0xff]
  %v339 = vld [vmem:[%s5 + $0x88] sm:$0xff]
  %v340 = vld [vmem:[%s5 + $0x90] sm:$0xff]
  %v341 = vld [vmem:[%s5 + $0x98] sm:$0xff]
  %v342 = vld [vmem:[%s5 + $0xa0] sm:$0xff]
  %v343 = vld [vmem:[%s5 + $0xa8] sm:$0xff]
  %v344 = vld [vmem:[%s5 + $0xb0] sm:$0xff]
  %v345 = vld [vmem:[%s5 + $0xb8] sm:$0xff]
  %v346 = vld [vmem:[%s5 + $0xc0] sm:$0xff]
  %v347 = vld [vmem:[%s5 + $0xc8] sm:$0xff]
  %v348 = vld [vmem:[%s5 + $0xd0] sm:$0xff]
  %v349 = vld [vmem:[%s5 + $0xd8] sm:$0xff]
  %v350 = vld [vmem:[%s5 + $0xe0] sm:$0xff]
  %v351 = vld [vmem:[%s5 + $0xe8] sm:$0xff]
  %v352 = vld [vmem:[%s5 + $0xf0] sm:$0xff]
  %v353 = vld [vmem:[%s5 + $0xf8] sm:$0xff]
  %v354 = vld [vmem:[%s5 + $0x100] sm:$0xff]
  %v355 = vld [vmem:[%s5 + $0x108] sm:$0xff]
  %v356 = vld [vmem:[%s5 + $0x110] sm:$0xff]
  %v357 = vld [vmem:[%s5 + $0x118] sm:$0xff]
  %v358 = vld [vmem:[%s5 + $0x120] sm:$0xff]
  %v359 = vld [vmem:[%s5 + $0x128] sm:$0xff]
  %v360 = vld [vmem:[%s5 + $0x130] sm:$0xff]
  %v361 = vld [vmem:[%s5 + $0x138] sm:$0xff]
  %v362 = vld [vmem:[%s5 + $0x140] sm:$0xff]
  %v363 = vld [vmem:[%s5 + $0x148] sm:$0xff]
  %v364 = vld [vmem:[%s5 + $0x150] sm:$0xff]
  %v365 = vld [vmem:[%s5 + $0x158] sm:$0xff]
  %vm366 = vcmask 785408
  %v368 = vsel %vm366, %v318, 0
  %v371 = vsel %vm366, %v321, 0
  %373 = vmatprep.subr.mxu0 0.0
  %374 = vmatpush1.msra.mxu0 %v322
  %375 = vmatprep.subr.mxu0 0.0
  %376 = vmatpush1.msra.mxu0 %v323
  %377 = vmatprep.subr.mxu0 0.0
  %378 = vmatpush1.msra.mxu0 %v324
  %379 = vmatprep.subr.mxu0 0.0
  %380 = vmatpush1.msra.mxu0 %v325
  %381 = vmatprep.subr.mxu0 0.0
  %382 = vmatpush1.msra.mxu0 %v326
  %383 = vmatprep.subr.mxu0 0.0
  %384 = vmatpush1.msra.mxu0 %v327
  %385 = vmatprep.subr.mxu0 0.0
  %386 = vmatpush1.msra.mxu0 %v328
  %387 = vmatprep.subr.mxu0 0.0
  %388 = vmatpush1.msra.mxu0 %v329
  %389 = vmatprep.subr.mxu0 0.0
  %390 = vmatpush1.msra.mxu0 %v330
  %391 = vmatprep.subr.mxu0 0.0
  %392 = vmatpush1.msra.mxu0 %v331
  %393 = vmatprep.subr.mxu0 0.0
  %394 = vmatpush1.msra.mxu0 %v332
  %395 = vmatprep.subr.mxu0 0.0
  %396 = vmatpush1.msra.mxu0 %v333
  %397 = vmatprep.subr.mxu0 0.0
  %398 = vmatpush1.msra.mxu0 %v334
  %399 = vmatprep.subr.mxu0 0.0
  %400 = vmatpush1.msra.mxu0 %v335
  %401 = vmatprep.subr.mxu0 0.0
  %402 = vmatpush1.msra.mxu0 %v336
  %403 = vmatprep.subr.mxu0 0.0
  %404 = vmatpush1.msra.mxu0 %v337
  %405 = vmatprep.subr.mxu0 0.0
  %406 = vmatpush1.msra.mxu0 %v338
  %407 = vmatprep.subr.mxu0 0.0
  %408 = vmatpush1.msra.mxu0 %v339
  %409 = vmatprep.subr.mxu0 0.0
  %410 = vmatpush1.msra.mxu0 %v340
  %411 = vmatprep.subr.mxu0 0.0
  %412 = vmatpush1.msra.mxu0 %v341
  %413 = vmatprep.subr.mxu0 0.0
  %414 = vmatpush1.msra.mxu0 %v342
  %415 = vmatprep.subr.mxu0 0.0
  %416 = vmatpush1.msra.mxu0 %v343
  %417 = vmatprep.subr.mxu0 0.0
  %418 = vmatpush1.msra.mxu0 %v344
  %419 = vmatprep.subr.mxu0 0.0
  %420 = vmatpush1.msra.mxu0 %v345
  %421 = vmatprep.subr.mxu0 0.0
  %422 = vmatpush1.msra.mxu0 %v346
  %423 = vmatprep.subr.mxu0 0.0
  %424 = vmatpush1.msra.mxu0 %v347
  %425 = vmatprep.subr.mxu0 0.0
  %426 = vmatpush1.msra.mxu0 %v348
  %427 = vmatprep.subr.mxu0 0.0
  %428 = vmatpush1.msra.mxu0 %v349
  %429 = vmatprep.subr.mxu0 0.0
  %430 = vmatpush1.msra.mxu0 %v350
  %431 = vmatprep.subr.mxu0 0.0
  %432 = vmatpush1.msra.mxu0 %v351
  %433 = vmatprep.subr.mxu0 0.0
  %434 = vmatpush1.msra.mxu0 %v352
  %435 = vmatprep.subr.mxu0 0.0
  %436 = vmatpush1.msra.mxu0 %v353
  %437 = vmatprep.mubr.f32.mxu0 %v317
  %438 = vmatmul.mubr.f32.gmra.mrb[0].mxu0 %v316
  %v439 = vpop.f32.mrb[0].mxu0
  %v440 = vadd.f32 0.0, %v439
  %v441 = vpop.f32.mrb[0].mxu0
  %442 = vmatprep.mubr.f32.mxu0 %v320
  %443 = vmatmul.mubr.f32.gmra.mrb[0].mxu0 %v319
  %v444 = vpop.f32.mrb[0].mxu0
  %v445 = vadd.f32 0.0, %v444
  %v446 = vpop.f32.mrb[0].mxu0
  %447 = vdwg.mxu0
  %448 = vmatprep.subr.mxu0 0.0
  %449 = vmatpush1.msra.mxu0 %v354
  %450 = vmatprep.subr.mxu0 0.0
  %451 = vmatpush1.msra.mxu0 %v355
  %452 = vmatprep.subr.mxu0 0.0
  %453 = vmatpush1.msra.mxu0 %v356
  %454 = vmatprep.subr.mxu0 0.0
  %455 = vmatpush1.msra.mxu0 %v357
  %456 = vmatprep.subr.mxu0 0.0
  %457 = vmatpush1.msra.mxu0 %v358
  %458 = vmatprep.subr.mxu0 0.0
  %459 = vmatpush1.msra.mxu0 %v359
  %460 = vmatprep.subr.mxu0 0.0
  %461 = vmatpush1.msra.mxu0 %v360
  %462 = vmatprep.subr.mxu0 0.0
  %463 = vmatpush1.msra.mxu0 %v361
  %464 = vmatprep.subr.mxu0 0.0
  %465 = vmatpush1.msra.mxu0 %v362
  %466 = vmatprep.subr.mxu0 0.0
  %467 = vmatpush1.msra.mxu0 %v363
  %468 = vmatprep.subr.mxu0 0.0
  %469 = vmatpush1.msra.mxu0 %v364
  %470 = vmatprep.subr.mxu0 0.0
  %471 = vmatpush1.msra.mxu0 %v365
  %472 = vmatprep.subr.mxu0 0.0
  %473 = vmatpush1.msra.mxu0 0.0
  %474 = vmatprep.subr.mxu0 0.0
  %475 = vmatpush1.msra.mxu0 0.0
  %476 = vmatprep.subr.mxu0 0.0
  %477 = vmatpush1.msra.mxu0 0.0
  %478 = vmatprep.subr.mxu0 0.0
  %479 = vmatpush1.msra.mxu0 0.0
  %480 = vmatprep.subr.mxu0 0.0
  %481 = vmatpush1.msra.mxu0 0.0
  %482 = vmatprep.subr.mxu0 0.0
  %483 = vmatpush1.msra.mxu0 0.0
  %484 = vmatprep.subr.mxu0 0.0
  %485 = vmatpush1.msra.mxu0 0.0
  %486 = vmatprep.subr.mxu0 0.0
  %487 = vmatpush1.msra.mxu0 0.0
  %488 = vmatprep.subr.mxu0 0.0
  %489 = vmatpush1.msra.mxu0 0.0
  %490 = vmatprep.subr.mxu0 0.0
  %491 = vmatpush1.msra.mxu0 0.0
  %492 = vmatprep.subr.mxu0 0.0
  %493 = vmatpush1.msra.mxu0 0.0
  %494 = vmatprep.subr.mxu0 0.0
  %495 = vmatpush1.msra.mxu0 0.0
  %496 = vmatprep.subr.mxu0 0.0
  %497 = vmatpush1.msra.mxu0 0.0
  %498 = vmatprep.subr.mxu0 0.0
  %499 = vmatpush1.msra.mxu0 0.0
  %500 = vmatprep.subr.mxu0 0.0
  %501 = vmatpush1.msra.mxu0 0.0
  %502 = vmatprep.subr.mxu0 0.0
  %503 = vmatpush1.msra.mxu0 0.0
  %504 = vmatprep.subr.mxu0 0.0
  %505 = vmatpush1.msra.mxu0 0.0
  %506 = vmatprep.subr.mxu0 0.0
  %507 = vmatpush1.msra.mxu0 0.0
  %508 = vmatprep.subr.mxu0 0.0
  %509 = vmatpush1.msra.mxu0 0.0
  %510 = vmatprep.subr.mxu0 0.0
  %511 = vmatpush1.msra.mxu0 0.0
  %512 = vmatprep.mubr.f32.mxu0 0.0
  %513 = vmatmul.mubr.f32.gmra.mrb[0].mxu0 %v368
  %v514 = vpop.f32.mrb[0].mxu0
  %v515 = vadd.f32 %v440, %v514
  %v516 = vpop.f32.mrb[0].mxu0
  %517 = vmatprep.mubr.f32.mxu0 0.0
  %518 = vmatmul.mubr.f32.gmra.mrb[0].mxu0 %v371
  %v519 = vpop.f32.mrb[0].mxu0
  %v520 = vadd.f32 %v445, %v519
  %v521 = vpop.f32.mrb[0].mxu0
  %522 = vdwg.mxu0
  %v523 = vrcp.pop %v515
  %v524 = vrcp.pop %v520
  %v525 = vmul.f32 %v515, %v523
  %v526 = vmul.f32 %v520, %v524
  %v527 = vsub.f32 2.0, %v525
  %v528 = vsub.f32 2.0, %v526
  %v529 = vmul.f32 %v523, %v527
  %v530 = vmul.f32 %v524, %v528
  %v531 = vld [vmem:[%s4] sm:$0xff]
  %v532 = vld [vmem:[%s4 + $0x8] sm:$0xff]
  %v533 = vld [vmem:[%s4 + $0x10] sm:$0xff]
  %v534 = vld [vmem:[%s4 + $0x18] sm:$0xff]
  %v535 = vld [vmem:[%s4 + $0x20] sm:$0xff]
  %v536 = vld [vmem:[%s4 + $0x28] sm:$0xff]
  %v537 = vld [vmem:[%s4 + $0x30] sm:$0xff]
  %v538 = vld [vmem:[%s4 + $0x38] sm:$0xff]
  %v539 = vld [vmem:[%s4 + $0x40] sm:$0xff]
  %v540 = vld [vmem:[%s4 + $0x48] sm:$0xff]
  %v541 = vld [vmem:[%s4 + $0x50] sm:$0xff]
  %v542 = vld [vmem:[%s4 + $0x58] sm:$0xff]
  %v544 = vsel %vm110, %v529, 0
  %v547 = vsel %vm110, %v530, 0
  %549 = vmatprep.subr.mxu0 %v532
  %550 = vmatpush1.msra.mxu0 %v531
  %551 = vmatprep.subr.mxu0 %v535
  %552 = vmatpush1.msra.mxu0 %v534
  %553 = vmatprep.subr.mxu0 %v538
  %554 = vmatpush1.msra.mxu0 %v537
  %555 = vmatprep.subr.mxu0 %v541
  %556 = vmatpush1.msra.mxu0 %v540
  %557 = vmatprep.subr.mxu0 0.0
  %558 = vmatpush1.msra.mxu0 0.0
  %559 = vmatprep.subr.mxu0 0.0
  %560 = vmatpush1.msra.mxu0 0.0
  %561 = vmatprep.subr.mxu0 0.0
  %562 = vmatpush1.msra.mxu0 0.0
  %563 = vmatprep.subr.mxu0 0.0
  %564 = vmatpush1.msra.mxu0 0.0
  %565 = vmatprep.subr.mxu0 0.0
  %566 = vmatpush1.msra.mxu0 0.0
  %567 = vmatprep.subr.mxu0 0.0
  %568 = vmatpush1.msra.mxu0 0.0
  %569 = vmatprep.subr.mxu0 0.0
  %570 = vmatpush1.msra.mxu0 0.0
  %571 = vmatprep.subr.mxu0 0.0
  %572 = vmatpush1.msra.mxu0 0.0
  %573 = vmatprep.subr.mxu0 0.0
  %574 = vmatpush1.msra.mxu0 0.0
  %575 = vmatprep.subr.mxu0 0.0
  %576 = vmatpush1.msra.mxu0 0.0
  %577 = vmatprep.subr.mxu0 0.0
  %578 = vmatpush1.msra.mxu0 0.0
  %579 = vmatprep.subr.mxu0 0.0
  %580 = vmatpush1.msra.mxu0 0.0
  %581 = vmatprep.subr.mxu0 0.0
  %582 = vmatpush1.msra.mxu0 0.0
  %583 = vmatprep.subr.mxu0 0.0
  %584 = vmatpush1.msra.mxu0 0.0
  %585 = vmatprep.subr.mxu0 0.0
  %586 = vmatpush1.msra.mxu0 0.0
  %587 = vmatprep.subr.mxu0 0.0
  %588 = vmatpush1.msra.mxu0 0.0
  %589 = vmatprep.subr.mxu0 0.0
  %590 = vmatpush1.msra.mxu0 0.0
  %591 = vmatprep.subr.mxu0 0.0
  %592 = vmatpush1.msra.mxu0 0.0
  %593 = vmatprep.subr.mxu0 0.0
  %594 = vmatpush1.msra.mxu0 0.0
  %595 = vmatprep.subr.mxu0 0.0
  %596 = vmatpush1.msra.mxu0 0.0
  %597 = vmatprep.subr.mxu0 0.0
  %598 = vmatpush1.msra.mxu0 0.0
  %599 = vmatprep.subr.mxu0 0.0
  %600 = vmatpush1.msra.mxu0 0.0
  %601 = vmatprep.subr.mxu0 0.0
  %602 = vmatpush1.msra.mxu0 0.0
  %603 = vmatprep.subr.mxu0 0.0
  %604 = vmatpush1.msra.mxu0 0.0
  %605 = vmatprep.subr.mxu0 0.0
  %606 = vmatpush1.msra.mxu0 0.0
  %607 = vmatprep.subr.mxu0 0.0
  %608 = vmatpush1.msra.mxu0 0.0
  %609 = vmatprep.subr.mxu0 0.0
  %610 = vmatpush1.msra.mxu0 0.0
  %611 = vmatprep.subr.mxu0 0.0
  %612 = vmatpush1.msra.mxu0 0.0
  %613 = vmatprep.mubr.f32.mxu0 0.0
  %614 = vmatmul.mubr.f32.gmra.mrb[0].mxu0 %v544
  %v615 = vpop.f32.mrb[0].mxu0
  %v616 = vadd.f32 0.0, %v615
  %v617 = vpop.f32.mrb[0].mxu0
  %v618 = vadd.f32 0.0, %v617
  %619 = vmatprep.mubr.f32.mxu0 0.0
  %620 = vmatmul.mubr.f32.gmra.mrb[0].mxu0 %v547
  %v621 = vpop.f32.mrb[0].mxu0
  %v622 = vadd.f32 0.0, %v621
  %v623 = vpop.f32.mrb[0].mxu0
  %v624 = vadd.f32 0.0, %v623
  %625 = vdwg.mxu0
  %626 = vmatprep.subr.mxu0 0.0
  %627 = vmatpush1.msra.mxu0 %v533
  %628 = vmatprep.subr.mxu0 0.0
  %629 = vmatpush1.msra.mxu0 %v536
  %630 = vmatprep.subr.mxu0 0.0
  %631 = vmatpush1.msra.mxu0 %v539
  %632 = vmatprep.subr.mxu0 0.0
  %633 = vmatpush1.msra.mxu0 %v542
  %634 = vmatprep.subr.mxu0 0.0
  %635 = vmatpush1.msra.mxu0 0.0
  %636 = vmatprep.subr.mxu0 0.0
  %637 = vmatpush1.msra.mxu0 0.0
  %638 = vmatprep.subr.mxu0 0.0
  %639 = vmatpush1.msra.mxu0 0.0
  %640 = vmatprep.subr.mxu0 0.0
  %641 = vmatpush1.msra.mxu0 0.0
  %642 = vmatprep.subr.mxu0 0.0
  %643 = vmatpush1.msra.mxu0 0.0
  %644 = vmatprep.subr.mxu0 0.0
  %645 = vmatpush1.msra.mxu0 0.0
  %646 = vmatprep.subr.mxu0 0.0
  %647 = vmatpush1.msra.mxu0 0.0
  %648 = vmatprep.subr.mxu0 0.0
  %649 = vmatpush1.msra.mxu0 0.0
  %650 = vmatprep.subr.mxu0 0.0
  %651 = vmatpush1.msra.mxu0 0.0
  %652 = vmatprep.subr.mxu0 0.0
  %653 = vmatpush1.msra.mxu0 0.0
  %654 = vmatprep.subr.mxu0 0.0
  %655 = vmatpush1.msra.mxu0 0.0
  %656 = vmatprep.subr.mxu0 0.0
  %657 = vmatpush1.msra.mxu0 0.0
  %658 = vmatprep.subr.mxu0 0.0
  %659 = vmatpush1.msra.mxu0 0.0
  %660 = vmatprep.subr.mxu0 0.0
  %661 = vmatpush1.msra.mxu0 0.0
  %662 = vmatprep.subr.mxu0 0.0
  %663 = vmatpush1.msra.mxu0 0.0
  %664 = vmatprep.subr.mxu0 0.0
  %665 = vmatpush1.msra.mxu0 0.0
  %666 = vmatprep.subr.mxu0 0.0
  %667 = vmatpush1.msra.mxu0 0.0
  %668 = vmatprep.subr.mxu0 0.0
  %669 = vmatpush1.msra.mxu0 0.0
  %670 = vmatprep.subr.mxu0 0.0
  %671 = vmatpush1.msra.mxu0 0.0
  %672 = vmatprep.subr.mxu0 0.0
  %673 = vmatpush1.msra.mxu0 0.0
  %674 = vmatprep.subr.mxu0 0.0
  %675 = vmatpush1.msra.mxu0 0.0
  %676 = vmatprep.subr.mxu0 0.0
  %677 = vmatpush1.msra.mxu0 0.0
  %678 = vmatprep.subr.mxu0 0.0
  %679 = vmatpush1.msra.mxu0 0.0
  %680 = vmatprep.subr.mxu0 0.0
  %681 = vmatpush1.msra.mxu0 0.0
  %682 = vmatprep.subr.mxu0 0.0
  %683 = vmatpush1.msra.mxu0 0.0
  %684 = vmatprep.subr.mxu0 0.0
  %685 = vmatpush1.msra.mxu0 0.0
  %686 = vmatprep.subr.mxu0 0.0
  %687 = vmatpush1.msra.mxu0 0.0
  %688 = vmatprep.subr.mxu0 0.0
  %689 = vmatpush1.msra.mxu0 0.0
  %690 = vmatprep.mubr.f32.mxu0 0.0
  %691 = vmatmul.mubr.f32.gmra.mrb[0].mxu0 %v544
  %v692 = vpop.f32.mrb[0].mxu0
  %v693 = vadd.f32 0.0, %v692
  %v694 = vpop.f32.mrb[0].mxu0
  %695 = vmatprep.mubr.f32.mxu0 0.0
  %696 = vmatmul.mubr.f32.gmra.mrb[0].mxu0 %v547
  %v697 = vpop.f32.mrb[0].mxu0
  %v698 = vadd.f32 0.0, %v697
  %v699 = vpop.f32.mrb[0].mxu0
  %700 = vdwg.mxu0
  %v701 = vmul.f32 %v316, %v616
  %v702 = vmul.f32 %v317, %v618
  %v703 = vmul.f32 %v318, %v693
  %v704 = vmul.f32 %v319, %v622
  %v705 = vmul.f32 %v320, %v624
  %v706 = vmul.f32 %v321, %v698
  %v707 = vld [vmem:[%s70] sm:$0x1]
  %v708 = vlaneseq
  %v709 = vshrl.u32 %v708, 7
  %v710 = vsub.s32 0, %v709
  %v711 = vrot.slane %v707, %v710
  %vm712 = vcmp.eq.s32.totalorder %v83, %v711
  %v713 = vsel %vm712, 1, 0
  %v714 = vcvt.s32.f32 %v713
  %v715 = vld [vmem:[#allocation2] sm:$0xff]
  %v716 = vld [vmem:[#allocation2 + $0x8] sm:$0xff]
  %v717 = vld [vmem:[#allocation2 + $0x10] sm:$0xff]
  %vm718 = vcmask 130048
  %v720 = vsel %vm718, %v714, 0
  %722 = vmatprep.subr.mxu0 %v702
  %723 = vmatpush1.msra.mxu0 %v701
  %724 = vmatprep.subr.mxu0 %v705
  %725 = vmatpush1.msra.mxu0 %v704
  %726 = vmatprep.subr.mxu0 0.0
  %727 = vmatpush1.msra.mxu0 0.0
  %728 = vmatprep.subr.mxu0 0.0
  %729 = vmatpush1.msra.mxu0 0.0
  %730 = vmatprep.subr.mxu0 0.0
  %731 = vmatpush1.msra.mxu0 0.0
  %732 = vmatprep.subr.mxu0 0.0
  %733 = vmatpush1.msra.mxu0 0.0
  %734 = vmatprep.subr.mxu0 0.0
  %735 = vmatpush1.msra.mxu0 0.0
  %736 = vmatprep.subr.mxu0 0.0
  %737 = vmatpush1.msra.mxu0 0.0
  %738 = vmatprep.subr.mxu0 0.0
  %739 = vmatpush1.msra.mxu0 0.0
  %740 = vmatprep.subr.mxu0 0.0
  %741 = vmatpush1.msra.mxu0 0.0
  %742 = vmatprep.subr.mxu0 0.0
  %743 = vmatpush1.msra.mxu0 0.0
  %744 = vmatprep.subr.mxu0 0.0
  %745 = vmatpush1.msra.mxu0 0.0
  %746 = vmatprep.subr.mxu0 0.0
  %747 = vmatpush1.msra.mxu0 0.0
  %748 = vmatprep.subr.mxu0 0.0
  %749 = vmatpush1.msra.mxu0 0.0
  %750 = vmatprep.subr.mxu0 0.0
  %751 = vmatpush1.msra.mxu0 0.0
  %752 = vmatprep.subr.mxu0 0.0
  %753 = vmatpush1.msra.mxu0 0.0
  %754 = vmatprep.subr.mxu0 0.0
  %755 = vmatpush1.msra.mxu0 0.0
  %756 = vmatprep.subr.mxu0 0.0
  %757 = vmatpush1.msra.mxu0 0.0
  %758 = vmatprep.subr.mxu0 0.0
  %759 = vmatpush1.msra.mxu0 0.0
  %760 = vmatprep.subr.mxu0 0.0
  %761 = vmatpush1.msra.mxu0 0.0
  %762 = vmatprep.subr.mxu0 0.0
  %763 = vmatpush1.msra.mxu0 0.0
  %764 = vmatprep.subr.mxu0 0.0
  %765 = vmatpush1.msra.mxu0 0.0
  %766 = vmatprep.subr.mxu0 0.0
  %767 = vmatpush1.msra.mxu0 0.0
  %768 = vmatprep.subr.mxu0 0.0
  %769 = vmatpush1.msra.mxu0 0.0
  %770 = vmatprep.subr.mxu0 0.0
  %771 = vmatpush1.msra.mxu0 0.0
  %772 = vmatprep.subr.mxu0 0.0
  %773 = vmatpush1.msra.mxu0 0.0
  %774 = vmatprep.subr.mxu0 0.0
  %775 = vmatpush1.msra.mxu0 0.0
  %776 = vmatprep.subr.mxu0 0.0
  %777 = vmatpush1.msra.mxu0 0.0
  %778 = vmatprep.subr.mxu0 0.0
  %779 = vmatpush1.msra.mxu0 0.0
  %780 = vmatprep.subr.mxu0 0.0
  %781 = vmatpush1.msra.mxu0 0.0
  %782 = vmatprep.subr.mxu0 0.0
  %783 = vmatpush1.msra.mxu0 0.0
  %784 = vmatprep.subr.mxu0 0.0
  %785 = vmatpush1.msra.mxu0 0.0
  %786 = vmatprep.mubr.f32.mxu0 0.0
  %787 = vmatmul.mubr.f32.gmra.mrb[0].mxu0 %v720
  %v788 = vpop.f32.mrb[0].mxu0
  %v789 = vadd.f32 0.0, %v788
  %v790 = vpop.f32.mrb[0].mxu0
  %v791 = vadd.f32 0.0, %v790
  %792 = vdwg.mxu0
  %793 = vmatprep.subr.mxu0 0.0
  %794 = vmatpush1.msra.mxu0 %v703
  %795 = vmatprep.subr.mxu0 0.0
  %796 = vmatpush1.msra.mxu0 %v706
  %797 = vmatprep.subr.mxu0 0.0
  %798 = vmatpush1.msra.mxu0 0.0
  %799 = vmatprep.subr.mxu0 0.0
  %800 = vmatpush1.msra.mxu0 0.0
  %801 = vmatprep.subr.mxu0 0.0
  %802 = vmatpush1.msra.mxu0 0.0
  %803 = vmatprep.subr.mxu0 0.0
  %804 = vmatpush1.msra.mxu0 0.0
  %805 = vmatprep.subr.mxu0 0.0
  %806 = vmatpush1.msra.mxu0 0.0
  %807 = vmatprep.subr.mxu0 0.0
  %808 = vmatpush1.msra.mxu0 0.0
  %809 = vmatprep.subr.mxu0 0.0
  %810 = vmatpush1.msra.mxu0 0.0
  %811 = vmatprep.subr.mxu0 0.0
  %812 = vmatpush1.msra.mxu0 0.0
  %813 = vmatprep.subr.mxu0 0.0
  %814 = vmatpush1.msra.mxu0 0.0
  %815 = vmatprep.subr.mxu0 0.0
  %816 = vmatpush1.msra.mxu0 0.0
  %817 = vmatprep.subr.mxu0 0.0
  %818 = vmatpush1.msra.mxu0 0.0
  %819 = vmatprep.subr.mxu0 0.0
  %820 = vmatpush1.msra.mxu0 0.0
  %821 = vmatprep.subr.mxu0 0.0
  %822 = vmatpush1.msra.mxu0 0.0
  %823 = vmatprep.subr.mxu0 0.0
  %824 = vmatpush1.msra.mxu0 0.0
  %825 = vmatprep.subr.mxu0 0.0
  %826 = vmatpush1.msra.mxu0 0.0
  %827 = vmatprep.subr.mxu0 0.0
  %828 = vmatpush1.msra.mxu0 0.0
  %829 = vmatprep.subr.mxu0 0.0
  %830 = vmatpush1.msra.mxu0 0.0
  %831 = vmatprep.subr.mxu0 0.0
  %832 = vmatpush1.msra.mxu0 0.0
  %833 = vmatprep.subr.mxu0 0.0
  %834 = vmatpush1.msra.mxu0 0.0
  %835 = vmatprep.subr.mxu0 0.0
  %836 = vmatpush1.msra.mxu0 0.0
  %837 = vmatprep.subr.mxu0 0.0
  %838 = vmatpush1.msra.mxu0 0.0
  %839 = vmatprep.subr.mxu0 0.0
  %840 = vmatpush1.msra.mxu0 0.0
  %841 = vmatprep.subr.mxu0 0.0
  %842 = vmatpush1.msra.mxu0 0.0
  %843 = vmatprep.subr.mxu0 0.0
  %844 = vmatpush1.msra.mxu0 0.0
  %845 = vmatprep.subr.mxu0 0.0
  %846 = vmatpush1.msra.mxu0 0.0
  %847 = vmatprep.subr.mxu0 0.0
  %848 = vmatpush1.msra.mxu0 0.0
  %849 = vmatprep.subr.mxu0 0.0
  %850 = vmatpush1.msra.mxu0 0.0
  %851 = vmatprep.subr.mxu0 0.0
  %852 = vmatpush1.msra.mxu0 0.0
  %853 = vmatprep.subr.mxu0 0.0
  %854 = vmatpush1.msra.mxu0 0.0
  %855 = vmatprep.subr.mxu0 0.0
  %856 = vmatpush1.msra.mxu0 0.0
  %857 = vmatprep.mubr.f32.mxu0 0.0
  %858 = vmatmul.mubr.f32.gmra.mrb[0].mxu0 %v720
  %v859 = vpop.f32.mrb[0].mxu0
  %v860 = vadd.f32 0.0, %v859
  %v861 = vpop.f32.mrb[0].mxu0
  %862 = vdwg.mxu0
  %v863 = vadd.f32 %v715, %v789
  %v864 = vadd.f32 %v716, %v791
  %v865 = vadd.f32 %v717, %v860
  %866 = vst [vmem:[#allocation2] sm:$0xff] %v863
  %867 = vst [vmem:[#allocation2 + $0x8] sm:$0xff] %v864
  %868 = vst.msk [vmem:[#allocation2 + $0x10] sm:$0xff] %vm366, %v865
  // Predicated region
  $region34: #{weave_gather.1} parent=0 // pred_check
    %p869 = pneg %p72
  $region35: #{weave_gather.1} parent=0 // pred_check_branch
    %871 = sbr.rel (%p869) target = $region37
  $region36: #{weave_gather.1} parent=0 // pred_region
    %v872 = vld [vmem:[#allocation2] sm:$0xff]
    %v873 = vld [vmem:[#allocation2 + $0x8] sm:$0xff]
    %v874 = vld [vmem:[#allocation2 + $0x10] sm:$0xff]
    %v875 = vld [vmem:[%s6] sm:$0xff]
    %v876 = vld [vmem:[%s6 + $0x8] sm:$0xff]
    %v877 = vld [vmem:[%s6 + $0x10] sm:$0xff]
    %v878 = vld [vmem:[%s6 + $0x18] sm:$0xff]
    %v879 = vld [vmem:[%s6 + $0x20] sm:$0xff]
    %v880 = vld [vmem:[%s6 + $0x28] sm:$0xff]
    %v881 = vld [vmem:[%s6 + $0x30] sm:$0xff]
    %v882 = vld [vmem:[%s6 + $0x38] sm:$0xff]
    %v883 = vld [vmem:[%s6 + $0x40] sm:$0xff]
    %v884 = vld [vmem:[%s6 + $0x48] sm:$0xff]
    %v885 = vld [vmem:[%s6 + $0x50] sm:$0xff]
    %v886 = vld [vmem:[%s6 + $0x58] sm:$0xff]
    %v887 = vld [vmem:[%s6 + $0x60] sm:$0xff]
    %v888 = vld [vmem:[%s6 + $0x68] sm:$0xff]
    %v889 = vld [vmem:[%s6 + $0x70] sm:$0xff]
    %v890 = vld [vmem:[%s6 + $0x78] sm:$0xff]
    %v891 = vld [vmem:[%s6 + $0x80] sm:$0xff]
    %v892 = vld [vmem:[%s6 + $0x88] sm:$0xff]
    %v893 = vld [vmem:[%s6 + $0x90] sm:$0xff]
    %v894 = vld [vmem:[%s6 + $0x98] sm:$0xff]
    %v895 = vld [vmem:[%s6 + $0xa0] sm:$0xff]
    %v896 = vld [vmem:[%s6 + $0xa8] sm:$0xff]
    %v897 = vld [vmem:[%s6 + $0xb0] sm:$0xff]
    %v898 = vld [vmem:[%s6 + $0xb8] sm:$0xff]
    %v899 = vld [vmem:[%s6 + $0xc0] sm:$0xff]
    %v900 = vld [vmem:[%s6 + $0xc8] sm:$0xff]
    %v901 = vld [vmem:[%s6 + $0xd0] sm:$0xff]
    %v902 = vld [vmem:[%s6 + $0xd8] sm:$0xff]
    %v903 = vld [vmem:[%s6 + $0xe0] sm:$0xff]
    %v904 = vld [vmem:[%s6 + $0xe8] sm:$0xff]
    %v905 = vld [vmem:[%s6 + $0xf0] sm:$0xff]
    %v906 = vld [vmem:[%s6 + $0xf8] sm:$0xff]
    %v907 = vld [vmem:[%s6 + $0x100] sm:$0xff]
    %v908 = vld [vmem:[%s6 + $0x108] sm:$0xff]
    %v909 = vld [vmem:[%s6 + $0x110] sm:$0xff]
    %v910 = vld [vmem:[%s6 + $0x118] sm:$0xff]
    %v911 = vld [vmem:[%s6 + $0x120] sm:$0xff]
    %v912 = vld [vmem:[%s6 + $0x128] sm:$0xff]
    %v913 = vld [vmem:[%s6 + $0x130] sm:$0xff]
    %v914 = vld [vmem:[%s6 + $0x138] sm:$0xff]
    %v915 = vld [vmem:[%s6 + $0x140] sm:$0xff]
    %v916 = vld [vmem:[%s6 + $0x148] sm:$0xff]
    %v917 = vld [vmem:[%s6 + $0x150] sm:$0xff]
    %v918 = vld [vmem:[%s6 + $0x158] sm:$0xff]
    %v920 = vsel %vm366, %v874, 0
    %922 = vmatprep.subr.mxu0 0.0
    %923 = vmatpush1.msra.mxu0 %v875
    %924 = vmatprep.subr.mxu0 0.0
    %925 = vmatpush1.msra.mxu0 %v876
    %926 = vmatprep.subr.mxu0 0.0
    %927 = vmatpush1.msra.mxu0 %v877
    %928 = vmatprep.subr.mxu0 0.0
    %929 = vmatpush1.msra.mxu0 %v878
    %930 = vmatprep.subr.mxu0 0.0
    %931 = vmatpush1.msra.mxu0 %v879
    %932 = vmatprep.subr.mxu0 0.0
    %933 = vmatpush1.msra.mxu0 %v880
    %934 = vmatprep.subr.mxu0 0.0
    %935 = vmatpush1.msra.mxu0 %v881
    %936 = vmatprep.subr.mxu0 0.0
    %937 = vmatpush1.msra.mxu0 %v882
    %938 = vmatprep.subr.mxu0 0.0
    %939 = vmatpush1.msra.mxu0 %v883
    %940 = vmatprep.subr.mxu0 0.0
    %941 = vmatpush1.msra.mxu0 %v884
    %942 = vmatprep.subr.mxu0 0.0
    %943 = vmatpush1.msra.mxu0 %v885
    %944 = vmatprep.subr.mxu0 0.0
    %945 = vmatpush1.msra.mxu0 %v886
    %946 = vmatprep.subr.mxu0 0.0
    %947 = vmatpush1.msra.mxu0 %v887
    %948 = vmatprep.subr.mxu0 0.0
    %949 = vmatpush1.msra.mxu0 %v888
    %950 = vmatprep.subr.mxu0 0.0
    %951 = vmatpush1.msra.mxu0 %v889
    %952 = vmatprep.subr.mxu0 0.0
    %953 = vmatpush1.msra.mxu0 %v890
    %954 = vmatprep.subr.mxu0 0.0
    %955 = vmatpush1.msra.mxu0 %v891
    %956 = vmatprep.subr.mxu0 0.0
    %957 = vmatpush1.msra.mxu0 %v892
    %958 = vmatprep.subr.mxu0 0.0
    %959 = vmatpush1.msra.mxu0 %v893
    %960 = vmatprep.subr.mxu0 0.0
    %961 = vmatpush1.msra.mxu0 %v894
    %962 = vmatprep.subr.mxu0 0.0
    %963 = vmatpush1.msra.mxu0 %v895
    %964 = vmatprep.subr.mxu0 0.0
    %965 = vmatpush1.msra.mxu0 %v896
    %966 = vmatprep.subr.mxu0 0.0
    %967 = vmatpush1.msra.mxu0 %v897
    %968 = vmatprep.subr.mxu0 0.0
    %969 = vmatpush1.msra.mxu0 %v898
    %970 = vmatprep.subr.mxu0 0.0
    %971 = vmatpush1.msra.mxu0 %v899
    %972 = vmatprep.subr.mxu0 0.0
    %973 = vmatpush1.msra.mxu0 %v900
    %974 = vmatprep.subr.mxu0 0.0
    %975 = vmatpush1.msra.mxu0 %v901
    %976 = vmatprep.subr.mxu0 0.0
    %977 = vmatpush1.msra.mxu0 %v902
    %978 = vmatprep.subr.mxu0 0.0
    %979 = vmatpush1.msra.mxu0 %v903
    %980 = vmatprep.subr.mxu0 0.0
    %981 = vmatpush1.msra.mxu0 %v904
    %982 = vmatprep.subr.mxu0 0.0
    %983 = vmatpush1.msra.mxu0 %v905
    %984 = vmatprep.subr.mxu0 0.0
    %985 = vmatpush1.msra.mxu0 %v906
    %986 = vmatprep.mubr.f32.mxu0 %v873
    %987 = vmatmul.mubr.f32.gmra.mrb[0].mxu0 %v872
    %v988 = vpop.f32.mrb[0].mxu0
    %v989 = vadd.f32 0.0, %v988
    %v990 = vpop.f32.mrb[0].mxu0
    %991 = vdwg.mxu0
    %992 = vmatprep.subr.mxu0 0.0
    %993 = vmatpush1.msra.mxu0 %v907
    %994 = vmatprep.subr.mxu0 0.0
    %995 = vmatpush1.msra.mxu0 %v908
    %996 = vmatprep.subr.mxu0 0.0
    %997 = vmatpush1.msra.mxu0 %v909
    %998 = vmatprep.subr.mxu0 0.0
    %999 = vmatpush1.msra.mxu0 %v910
    %1000 = vmatprep.subr.mxu0 0.0
    %1001 = vmatpush1.msra.mxu0 %v911
    %1002 = vmatprep.subr.mxu0 0.0
    %1003 = vmatpush1.msra.mxu0 %v912
    %1004 = vmatprep.subr.mxu0 0.0
    %1005 = vmatpush1.msra.mxu0 %v913
    %1006 = vmatprep.subr.mxu0 0.0
    %1007 = vmatpush1.msra.mxu0 %v914
    %1008 = vmatprep.subr.mxu0 0.0
    %1009 = vmatpush1.msra.mxu0 %v915
    %1010 = vmatprep.subr.mxu0 0.0
    %1011 = vmatpush1.msra.mxu0 %v916
    %1012 = vmatprep.subr.mxu0 0.0
    %1013 = vmatpush1.msra.mxu0 %v917
    %1014 = vmatprep.subr.mxu0 0.0
    %1015 = vmatpush1.msra.mxu0 %v918
    %1016 = vmatprep.subr.mxu0 0.0
    %1017 = vmatpush1.msra.mxu0 0.0
    %1018 = vmatprep.subr.mxu0 0.0
    %1019 = vmatpush1.msra.mxu0 0.0
    %1020 = vmatprep.subr.mxu0 0.0
    %1021 = vmatpush1.msra.mxu0 0.0
    %1022 = vmatprep.subr.mxu0 0.0
    %1023 = vmatpush1.msra.mxu0 0.0
    %1024 = vmatprep.subr.mxu0 0.0
    %1025 = vmatpush1.msra.mxu0 0.0
    %1026 = vmatprep.subr.mxu0 0.0
    %1027 = vmatpush1.msra.mxu0 0.0
    %1028 = vmatprep.subr.mxu0 0.0
    %1029 = vmatpush1.msra.mxu0 0.0
    %1030 = vmatprep.subr.mxu0 0.0
    %1031 = vmatpush1.msra.mxu0 0.0
    %1032 = vmatprep.subr.mxu0 0.0
    %1033 = vmatpush1.msra.mxu0 0.0
    %1034 = vmatprep.subr.mxu0 0.0
    %1035 = vmatpush1.msra.mxu0 0.0
    %1036 = vmatprep.subr.mxu0 0.0
    %1037 = vmatpush1.msra.mxu0 0.0
    %1038 = vmatprep.subr.mxu0 0.0
    %1039 = vmatpush1.msra.mxu0 0.0
    %1040 = vmatprep.subr.mxu0 0.0
    %1041 = vmatpush1.msra.mxu0 0.0
    %1042 = vmatprep.subr.mxu0 0.0
    %1043 = vmatpush1.msra.mxu0 0.0
    %1044 = vmatprep.subr.mxu0 0.0
    %1045 = vmatpush1.msra.mxu0 0.0
    %1046 = vmatprep.subr.mxu0 0.0
    %1047 = vmatpush1.msra.mxu0 0.0
    %1048 = vmatprep.subr.mxu0 0.0
    %1049 = vmatpush1.msra.mxu0 0.0
    %1050 = vmatprep.subr.mxu0 0.0
    %1051 = vmatpush1.msra.mxu0 0.0
    %1052 = vmatprep.subr.mxu0 0.0
    %1053 = vmatpush1.msra.mxu0 0.0
    %1054 = vmatprep.subr.mxu0 0.0
    %1055 = vmatpush1.msra.mxu0 0.0
    %1056 = vmatprep.mubr.f32.mxu0 0.0
    %1057 = vmatmul.mubr.f32.gmra.mrb[0].mxu0 %v920
    %v1058 = vpop.f32.mrb[0].mxu0
    %v1059 = vadd.f32 %v989, %v1058
    %v1060 = vpop.f32.mrb[0].mxu0
    %1061 = vdwg.mxu0
    %1062 = vst.msk [vmem:[%s7] sm:$0xff] %vm110, %v1059
  $region37: #{weave_gather.1} parent=0 // pred_fallthru
    _
  // Predicated region
  $region38: #{weave_gather.1} parent=0 // pred_check
    _
  $region39: #{weave_gather.1} parent=0 // pred_check_branch
    %1064 = sbr.rel (0) target = $region41
  $region40: #{weave_gather.1} parent=0 // pred_region
    _
  $region41: #{weave_gather.1} parent=0 // pred_fallthru
    _
  // Predicated region
  $region42: #{weave_gather.1} parent=0 // pred_check
    _
  $region43: #{weave_gather.1} parent=0 // pred_check_branch
    %1066 = sbr.rel (0) target = $region45
  $region44: #{weave_gather.1} parent=0 // pred_region
    _
  $region45: #{weave_gather.1} parent=0 // pred_fallthru
    _

</llo_original>
